<compile_context>
chip_gen: v7x
topology: tpu7x:2x2x1
jax: 0.10.0
libtpu: 0.0.40
codegen_flags: <defaults>
</compile_context>

<pallas_src>
import functools

import jax
import jax.numpy as jnp
from jax.experimental import pallas as pl
from jax.experimental.pallas import tpu as pltpu


_LANE = 128


def _round_up(x, m):
    return (x + m - 1) // m * m


def _pad2(x, rows, cols):
    r, c = x.shape
    return jnp.pad(x, ((0, rows - r), (0, cols - c)))


def _vmem_capacity_bytes():
    try:
        cap = int(pltpu.get_tpu_info().vmem_capacity_bytes)
        if cap > 0:
            return cap
    except Exception:
        pass
    return 64 * 1024 * 1024  # conservative (v7x per-TC physical VMEM)


# ---------------------------------------------------------------------------
# Small-graph regime: whole SGC forward fused into ONE kernel.
# ---------------------------------------------------------------------------
def _sgc_fused_kernel(a_ref, h_ref, *rest, num_layers, w_first):
    """rest = (w0, b0, w1, b1, ..., o_ref); per-layer padded widths differ."""
    o_ref = rest[-1]
    wb = rest[:-1]
    a = a_ref[...]
    h = h_ref[...]
    out = None
    for layer in range(num_layers):
        w = wb[2 * layer][...]          # bf16 (fp_in, fp_out)
        b = wb[2 * layer + 1][...]      # f32  (1, fp_out)
        if w_first[layer]:
            # A(A H)W == A(A(H W)): propagate at the (narrower) output width.
            g = jnp.dot(h, w, preferred_element_type=jnp.float32
                        ).astype(jnp.bfloat16)
            h1 = jnp.dot(a, g, preferred_element_type=jnp.float32)
            out = jnp.dot(a, h1.astype(jnp.bfloat16),
                          preferred_element_type=jnp.float32) + b
        else:
            h1 = jnp.dot(a, h, preferred_element_type=jnp.float32)
            h2 = jnp.dot(a, h1.astype(jnp.bfloat16),
                         preferred_element_type=jnp.float32)
            out = jnp.dot(h2.astype(jnp.bfloat16), w,
                          preferred_element_type=jnp.float32) + b
        if layer != num_layers - 1:
            out = jnp.maximum(out, 0.0)
            h = out.astype(jnp.bfloat16)
    o_ref[...] = out


def _run_fused(prep, in_feat):
    n = prep["n"]
    n_pad = prep["n_pad"]
    layers = prep["layers"]
    num_layers = len(layers)
    vmem_limit = prep["vmem_limit"]

    fp_in0 = layers[0]["fp_in"]
    h_p = _pad2(in_feat, n_pad, fp_in0).astype(jnp.bfloat16)

    wb_inputs, wb_specs, w_first = [], [], []
    flops = 0
    for L in layers:
        fp_i, fp_o = L["fp_in"], L["fp_out"]
        w_first.append(L["w_first"])
        wb_inputs.append(L["w_p"])
        wb_inputs.append(L["b_p"])
        wb_specs.append(pl.BlockSpec((fp_i, fp_o), lambda: (0, 0)))
        wb_specs.append(pl.BlockSpec((1, fp_o), lambda: (0, 0)))
        prop_width = fp_o if L["w_first"] else fp_i
        flops += 2 * n_pad * fp_i * fp_o + 2 * 2 * n_pad * n_pad * prop_width

    fp_out_last = layers[-1]["fp_out"]
    bytes_accessed = (prep["a_p"].size * 2 + h_p.size * 2
                      + sum(int(x.size) * x.dtype.itemsize for x in wb_inputs)
                      + n_pad * fp_out_last * 4)

    kernel = functools.partial(_sgc_fused_kernel, num_layers=num_layers,
                               w_first=tuple(w_first))
    out = pl.pallas_call(
        kernel,
        out_shape=jax.ShapeDtypeStruct((n_pad, fp_out_last), jnp.float32),
        in_specs=[pl.BlockSpec((n_pad, n_pad), lambda: (0, 0)),
                  pl.BlockSpec((n_pad, fp_in0), lambda: (0, 0))] + wb_specs,
        out_specs=pl.BlockSpec((n_pad, fp_out_last), lambda: (0, 0)),
        compiler_params=pltpu.CompilerParams(vmem_limit_bytes=vmem_limit),
        cost_estimate=pl.CostEstimate(flops=int(flops), transcendentals=0,
                                      bytes_accessed=int(bytes_accessed)),
    )(prep["a_p"], h_p, *wb_inputs)
    return out[:n, :prep["f_out_last"]]


# ---------------------------------------------------------------------------
# Large-graph regime: tiled, gridded, two streamed passes over A_hat per layer.
# ---------------------------------------------------------------------------
def _linear_kernel(h_ref, w_ref, o_ref):
    o_ref[...] = jnp.dot(h_ref[...], w_ref[...],
                         preferred_element_type=jnp.float32).astype(o_ref.dtype)


def _linear(h_bf16, w_bf16, *, tm, vmem_limit, budget):
    """G = H @ W (no bias), row-tiled, W resident. Used for W-first layers."""
    n, fp_in = h_bf16.shape
    fp_out = w_bf16.shape[1]
    tm_lin = tm
    while tm_lin > 128 and (2 * tm_lin * fp_in * 2 + 2 * fp_in * fp_out * 2
                            + 2 * tm_lin * fp_out * 2 + (2 << 20)) > budget:
        tm_lin //= 2
    grid = (n // tm_lin,)
    flops = 2 * n * fp_in * fp_out
    bytes_accessed = h_bf16.size * 2 + w_bf16.size * 2 + n * fp_out * 2
    return pl.pallas_call(
        _linear_kernel,
        out_shape=jax.ShapeDtypeStruct((n, fp_out), jnp.bfloat16),
        grid_spec=pltpu.PrefetchScalarGridSpec(
            num_scalar_prefetch=0, grid=grid,
            in_specs=[pl.BlockSpec((tm_lin, fp_in), lambda i: (i, 0)),
                      pl.BlockSpec((fp_in, fp_out), lambda i: (0, 0))],
            out_specs=pl.BlockSpec((tm_lin, fp_out), lambda i: (i, 0))),
        compiler_params=pltpu.CompilerParams(
            dimension_semantics=("parallel",),
            vmem_limit_bytes=vmem_limit),
        cost_estimate=pl.CostEstimate(flops=int(flops), transcendentals=0,
                                      bytes_accessed=int(bytes_accessed)),
    )(h_bf16, w_bf16)


def _prop_accum_kernel(a_ref, h_ref, o_ref, acc_ref, *, tk, resident_h):
    """o = A @ H, tiled over (row, K) with fp32 accumulator."""
    k = pl.program_id(1)

    @pl.when(k == 0)
    def _init():
        acc_ref[...] = jnp.zeros_like(acc_ref)

    if resident_h:
        start = pl.multiple_of(k * tk, tk)
        h = h_ref[pl.ds(start, tk), :]
    else:
        h = h_ref[...]
    acc_ref[...] += jnp.dot(a_ref[...], h, preferred_element_type=jnp.float32)

    @pl.when(k == pl.num_programs(1) - 1)
    def _fin():
        o_ref[...] = acc_ref[...].astype(o_ref.dtype)


def _prop_bias_kernel(a_ref, h_ref, b_ref, o_ref, acc_ref, *, tk, resident_h,
                      apply_relu):
    """o = relu?((A @ H1) + b); W already folded into H1 (W-first layers)."""
    k = pl.program_id(1)

    @pl.when(k == 0)
    def _init():
        acc_ref[...] = jnp.zeros_like(acc_ref)

    if resident_h:
        start = pl.multiple_of(k * tk, tk)
        h = h_ref[pl.ds(start, tk), :]
    else:
        h = h_ref[...]
    acc_ref[...] += jnp.dot(a_ref[...], h, preferred_element_type=jnp.float32)

    @pl.when(k == pl.num_programs(1) - 1)
    def _fin():
        out = acc_ref[...] + b_ref[...]
        if apply_relu:
            out = jnp.maximum(out, 0.0)
        o_ref[...] = out.astype(o_ref.dtype)


def _prop_linear_kernel(a_ref, h_ref, w_ref, b_ref, o_ref, acc_ref, *, tk,
                        resident_h, apply_relu):
    """o = relu?((A @ H1) @ W + b); W matmul fused into the last-K epilogue."""
    k = pl.program_id(1)

    @pl.when(k == 0)
    def _init():
        acc_ref[...] = jnp.zeros_like(acc_ref)

    if resident_h:
        start = pl.multiple_of(k * tk, tk)
        h = h_ref[pl.ds(start, tk), :]
    else:
        h = h_ref[...]
    acc_ref[...] += jnp.dot(a_ref[...], h, preferred_element_type=jnp.float32)

    @pl.when(k == pl.num_programs(1) - 1)
    def _fin():
        out = jnp.dot(acc_ref[...].astype(jnp.bfloat16), w_ref[...],
                      preferred_element_type=jnp.float32) + b_ref[...]
        if apply_relu:
            out = jnp.maximum(out, 0.0)
        o_ref[...] = out.astype(o_ref.dtype)


def _fits_resident(n_pad, fp, tm, tk, budget):
    a_tile = 2 * tm * tk * 2
    h_full = 2 * n_pad * fp * 2          # assume worst-case double buffering
    acc = tm * fp * 4
    out_tile = 2 * tm * fp * 4
    return a_tile + h_full + acc + out_tile + (2 << 20) <= budget


def _h_spec_and_bytes(h_bf16, *, tm, tk, resident_h):
    n, fp = h_bf16.shape
    if resident_h:
        spec = pl.BlockSpec((n, fp), lambda i, k: (0, 0))
        h_bytes = h_bf16.size * 2                      # loaded once
    else:
        spec = pl.BlockSpec((tk, fp), lambda i, k: (k, 0))
        h_bytes = (n // tm) * h_bf16.size * 2          # re-streamed per row tile
    return spec, h_bytes


def _propagate(a_bf16, h_bf16, *, tm, tk, resident_h, vmem_limit):
    n = a_bf16.shape[0]
    fp = h_bf16.shape[1]
    grid = (n // tm, n // tk)
    h_spec, h_bytes = _h_spec_and_bytes(h_bf16, tm=tm, tk=tk,
                                        resident_h=resident_h)
    kernel = functools.partial(_prop_accum_kernel, tk=tk, resident_h=resident_h)
    flops = 2 * n * n * fp
    bytes_accessed = a_bf16.size * 2 + h_bytes + n * fp * 2
    return pl.pallas_call(
        kernel,
        out_shape=jax.ShapeDtypeStruct((n, fp), jnp.bfloat16),
        grid_spec=pltpu.PrefetchScalarGridSpec(
            num_scalar_prefetch=0, grid=grid,
            in_specs=[pl.BlockSpec((tm, tk), lambda i, k: (i, k)), h_spec],
            out_specs=pl.BlockSpec((tm, fp), lambda i, k: (i, 0)),
            scratch_shapes=[pltpu.VMEM((tm, fp), jnp.float32)]),
        compiler_params=pltpu.CompilerParams(
            dimension_semantics=("parallel", "arbitrary"),
            vmem_limit_bytes=vmem_limit),
        cost_estimate=pl.CostEstimate(flops=int(flops), transcendentals=0,
                                      bytes_accessed=int(bytes_accessed)),
    )(a_bf16, h_bf16)


def _propagate_bias(a_bf16, h1_bf16, b_f32, *, apply_relu, out_dtype, tm, tk,
                    resident_h, vmem_limit):
    n = a_bf16.shape[0]
    fp = h1_bf16.shape[1]
    grid = (n // tm, n // tk)
    h_spec, h_bytes = _h_spec_and_bytes(h1_bf16, tm=tm, tk=tk,
                                        resident_h=resident_h)
    kernel = functools.partial(_prop_bias_kernel, tk=tk, resident_h=resident_h,
                               apply_relu=apply_relu)
    flops = 2 * n * n * fp
    bytes_accessed = (a_bf16.size * 2 + h_bytes + b_f32.size * 4
                      + n * fp * jnp.dtype(out_dtype).itemsize)
    return pl.pallas_call(
        kernel,
        out_shape=jax.ShapeDtypeStruct((n, fp), out_dtype),
        grid_spec=pltpu.PrefetchScalarGridSpec(
            num_scalar_prefetch=0, grid=grid,
            in_specs=[pl.BlockSpec((tm, tk), lambda i, k: (i, k)),
                      h_spec,
                      pl.BlockSpec((1, fp), lambda i, k: (0, 0))],
            out_specs=pl.BlockSpec((tm, fp), lambda i, k: (i, 0)),
            scratch_shapes=[pltpu.VMEM((tm, fp), jnp.float32)]),
        compiler_params=pltpu.CompilerParams(
            dimension_semantics=("parallel", "arbitrary"),
            vmem_limit_bytes=vmem_limit),
        cost_estimate=pl.CostEstimate(flops=int(flops), transcendentals=0,
                                      bytes_accessed=int(bytes_accessed)),
    )(a_bf16, h1_bf16, b_f32)


def _propagate_linear(a_bf16, h1_bf16, w_bf16, b_f32, *, apply_relu, out_dtype,
                      tm, tk, resident_h, vmem_limit):
    n = a_bf16.shape[0]
    fp_in = h1_bf16.shape[1]
    fp_out = w_bf16.shape[1]
    grid = (n // tm, n // tk)
    h_spec, h_bytes = _h_spec_and_bytes(h1_bf16, tm=tm, tk=tk,
                                        resident_h=resident_h)
    kernel = functools.partial(_prop_linear_kernel, tk=tk,
                               resident_h=resident_h, apply_relu=apply_relu)
    flops = 2 * n * n * fp_in + 2 * n * fp_in * fp_out
    bytes_accessed = (a_bf16.size * 2 + h_bytes + w_bf16.size * 2
                      + b_f32.size * 4
                      + n * fp_out * jnp.dtype(out_dtype).itemsize)
    return pl.pallas_call(
        kernel,
        out_shape=jax.ShapeDtypeStruct((n, fp_out), out_dtype),
        grid_spec=pltpu.PrefetchScalarGridSpec(
            num_scalar_prefetch=0, grid=grid,
            in_specs=[pl.BlockSpec((tm, tk), lambda i, k: (i, k)),
                      h_spec,
                      pl.BlockSpec((fp_in, fp_out), lambda i, k: (0, 0)),
                      pl.BlockSpec((1, fp_out), lambda i, k: (0, 0))],
            out_specs=pl.BlockSpec((tm, fp_out), lambda i, k: (i, 0)),
            scratch_shapes=[pltpu.VMEM((tm, fp_in), jnp.float32)]),
        compiler_params=pltpu.CompilerParams(
            dimension_semantics=("parallel", "arbitrary"),
            vmem_limit_bytes=vmem_limit),
        cost_estimate=pl.CostEstimate(flops=int(flops), transcendentals=0,
                                      bytes_accessed=int(bytes_accessed)),
    )(a_bf16, h1_bf16, w_bf16, b_f32)


def _plan_tiled(n1, fp_max, cap):
    """Pick (tm, tk, n_pad) from the VMEM capacity; prefer big A tiles."""
    budget = int(cap * 0.55)
    for tm in (1024, 512, 256, 128):
        if tm > n1:
            continue
        # keep >= 2 row tiles so ("parallel", ...) can split rows across v7x's
        # two TensorCores (no-op on single-TC v5e/v6e)
        if n1 > 128 and tm > max(128, n1 // 2):
            continue
        for tk in (2048, 1024, 512, 256, 128):
            if tk > n1:
                continue
            n_pad = _round_up(n1, max(tm, tk))
            if n_pad - n1 > max(n1 // 4, 128):        # bound padding waste
                continue
            a_tile = 2 * tm * tk * 2                  # double-buffered bf16 A
            h_stream = 2 * tk * fp_max * 2
            acc = tm * fp_max * 4
            out_tile = 2 * tm * fp_max * 4
            wb = fp_max * fp_max * 2 + fp_max * 4
            if a_tile + h_stream + acc + out_tile + wb + (2 << 20) <= budget:
                return tm, tk, n_pad
    return 128, 128, _round_up(n1, 128)


def _run_tiled(prep, in_feat):
    n = prep["n"]
    n_pad = prep["n_pad"]
    tm, tk = prep["tm"], prep["tk"]
    vmem_limit = prep["vmem_limit"]
    budget = prep["budget"]
    a_p = prep["a_p"]
    layers = prep["layers"]
    num_layers = len(layers)

    h = _pad2(in_feat, n_pad, layers[0]["fp_in"]).astype(jnp.bfloat16)

    for i, L in enumerate(layers):
        last = (i == num_layers - 1)
        out_dtype = jnp.float32 if last else jnp.bfloat16
        if L["w_first"]:
            # G = H @ W (narrow width), then two A-passes at width fp_out with
            # bias (+ReLU) in the second pass epilogue.
            g = _linear(h, L["w_p"], tm=tm, vmem_limit=vmem_limit, budget=budget)
            res = _fits_resident(n_pad, L["fp_out"], tm, tk, budget)
            h1 = _propagate(a_p, g, tm=tm, tk=tk, resident_h=res,
                            vmem_limit=vmem_limit)
            h = _propagate_bias(a_p, h1, L["b_p"], apply_relu=not last,
                                out_dtype=out_dtype, tm=tm, tk=tk,
                                resident_h=res, vmem_limit=vmem_limit)
        else:
            res = _fits_resident(n_pad, L["fp_in"], tm, tk, budget)
            h1 = _propagate(a_p, h, tm=tm, tk=tk, resident_h=res,
                            vmem_limit=vmem_limit)
            h = _propagate_linear(a_p, h1, L["w_p"], L["b_p"],
                                  apply_relu=not last, out_dtype=out_dtype,
                                  tm=tm, tk=tk, resident_h=res,
                                  vmem_limit=vmem_limit)
    return h[:n, :prep["f_out_last"]]


# ---------------------------------------------------------------------------
# Public API: one-time prep (hoisted pad + bf16 cast) + forward.
# ---------------------------------------------------------------------------
def prepare_sgc(a_hat, params, *, force_tiled=False):
    """One-time host-side prep: pads + bf16-casts A_hat and per-layer W/b.

    Do this OUTSIDE the per-call path and reuse across forward calls -- the
    pad + cast of A_hat costs ~6*N^2 bytes of HBM traffic, comparable to a
    propagation pass, and should be amortized.
    W must be stored as (f_in, f_out) (transpose of torch nn.Linear.weight).
    """
    n = a_hat.shape[0]
    cap = _vmem_capacity_bytes()
    vmem_limit = min(int(cap * 0.9), 120 * 1024 * 1024)
    budget = int(cap * 0.55)
    # Fused (gridless, single-TC) path threshold: lower on v7x-class chips
    # (small VMEM proxy) since its two TCs favor the row-parallel tiled path.
    small_thresh = 512 if cap < (100 << 20) else 1024
    fused = (not force_tiled) and n <= small_thresh

    layers = []
    for (w, b) in params:
        f_in, f_out = w.shape
        fp_i, fp_o = _round_up(f_in, _LANE), _round_up(f_out, _LANE)
        layers.append(dict(
            w_p=_pad2(w, fp_i, fp_o).astype(jnp.bfloat16),
            b_p=_pad2(b, 1, fp_o).astype(jnp.float32),
            w_first=bool(fp_o <= fp_i), fp_in=fp_i, fp_out=fp_o))

    prep = dict(n=n, f_out_last=params[-1][0].shape[1], layers=layers,
                vmem_limit=vmem_limit, budget=budget)
    if fused:
        n_pad = _round_up(n, _LANE)
        prep.update(mode="fused", n_pad=n_pad,
                    a_p=_pad2(a_hat, n_pad, n_pad).astype(jnp.bfloat16))
    else:
        n1 = _round_up(n, _LANE)
        fp_max = max(max(L["fp_in"], L["fp_out"]) for L in layers)
        tm, tk, n_pad = _plan_tiled(n1, fp_max, cap)
        prep.update(mode="tiled", n_pad=n_pad, tm=tm, tk=tk,
                    a_p=_pad2(a_hat, n_pad, n_pad).astype(jnp.bfloat16))
    return prep


def run_sgc(prep, in_feat):
    """SGC.forward using prepared (pre-padded, bf16) adjacency and weights."""
    if prep["mode"] == "fused":
        return _run_fused(prep, in_feat)
    return _run_tiled(prep, in_feat)


def sgc_forward(a_hat, in_feat, params, *, force_tiled=False):
    """Convenience wrapper: prep + run in one call (prep redone per call)."""
    return run_sgc(prepare_sgc(a_hat, params, force_tiled=force_tiled), in_feat)


# ---------------------------------------------------------------------------
# Reference + input builders + self-check.
# ---------------------------------------------------------------------------
def sgc_reference(a_hat, in_feat, params):
    """Pure-JAX fp32 reference for correctness checks."""
    h = in_feat
    num_layers = len(params)
    for i, (w, b) in enumerate(params):
        h = a_hat @ (a_hat @ h)
        h = h @ w + b
        if i != num_layers - 1:
            h = jnp.maximum(h, 0.0)
    return h


def build_normalized_adjacency(key, n):
    """Deterministic random undirected graph, symmetric 'both' normalization."""
    probs = jax.random.uniform(key, (n, n))
    adj = (probs < 0.1).astype(jnp.float32)
    adj = jnp.maximum(adj, adj.T)                      # symmetrize
    ring = jnp.eye(n, k=1) + jnp.eye(n, k=-1)
    ring = ring.at[0, n - 1].set(1.0).at[n - 1, 0].set(1.0)
    adj = jnp.maximum(adj, ring.astype(jnp.float32))
    adj = adj * (1.0 - jnp.eye(n))                     # no self loops
    deg = adj.sum(axis=1)
    d_inv_sqrt = jnp.where(deg > 0, 1.0 / jnp.sqrt(deg), 0.0)
    return d_inv_sqrt[:, None] * adj * d_inv_sqrt[None, :]


def init_sgc_params(key, in_feats, h_feats, num_classes, num_layers):
    """Deterministic parameter init matching the SGC.__init__ layer shapes."""
    dims = []
    if num_layers > 1:
        for i in range(num_layers):
            if i == 0:
                dims.append((in_feats, h_feats))
            elif i == num_layers - 1:
                dims.append((h_feats, num_classes))
            else:
                dims.append((h_feats, h_feats))
    else:
        dims.append((in_feats, num_classes))

    params = []
    for i, (f_in, f_out) in enumerate(dims):
        kw, kb = jax.random.split(jax.random.fold_in(key, i))
        scale = 1.0 / jnp.sqrt(jnp.float32(f_in))
        w = jax.random.uniform(kw, (f_in, f_out), jnp.float32, -scale, scale)
        b = jax.random.uniform(kb, (1, f_out), jnp.float32, -scale, scale)
        params.append((w, b))
    return params


def _check(out, ref, name):
    err = float(jnp.max(jnp.abs(out - ref)))
    scale = float(jnp.max(jnp.abs(ref))) + 1e-6
    assert err <= 0.05 * scale + 0.05, f"{name} mismatch: err={err} scale={scale}"


if __name__ == "__main__":
    # Small problem consistent with the module: a graph with N nodes.
    N = 64
    in_feats, h_feats, num_classes, num_layers = 32, 16, 8, 2

    key = jax.random.PRNGKey(0)
    k_graph, k_feat, k_param = jax.random.split(key, 3)

    a_hat = build_normalized_adjacency(k_graph, N)
    in_feat = jax.random.normal(k_feat, (N, in_feats), jnp.float32)
    params = init_sgc_params(k_param, in_feats, h_feats, num_classes, num_layers)

    ref = sgc_reference(a_hat, in_feat, params)

    # One-time prep (pad + bf16 cast of A_hat / weights), hoisted out of the
    # per-call path; the jitted forwards reuse the prepared arrays.
    prep_fused = prepare_sgc(a_hat, params)
    fwd_fused = jax.jit(functools.partial(run_sgc, prep_fused))
    out_fused = fwd_fused(in_feat)
    jax.block_until_ready(out_fused)

    # Also exercise the scalable tiled/gridded path on the same data.
    prep_tiled = prepare_sgc(a_hat, params, force_tiled=True)
    fwd_tiled = jax.jit(functools.partial(run_sgc, prep_tiled))
    out_tiled = fwd_tiled(in_feat)
    jax.block_until_ready(out_tiled)

    assert out_fused.shape == (N, num_classes)
    assert out_tiled.shape == (N, num_classes)
    _check(out_fused, ref, "fused")
    _check(out_tiled, ref, "tiled")
    print("KERNEL_OK")
</pallas_src>

<mosaic_0001>
module attributes {stable_mosaic.version = 11 : i64} {
  func.func @_sgc_fused_kernel(%arg0: memref<128x128xbf16, #tpu.memory_space<vmem>>, %arg1: memref<128x128xbf16, #tpu.memory_space<vmem>>, %arg2: memref<128x128xbf16, #tpu.memory_space<vmem>>, %arg3: memref<1x128xf32, #tpu.memory_space<vmem>>, %arg4: memref<128x128xbf16, #tpu.memory_space<vmem>>, %arg5: memref<1x128xf32, #tpu.memory_space<vmem>>, %arg6: memref<128x128xf32, #tpu.memory_space<vmem>>) attributes {dimension_semantics = [], scalar_prefetch = 0 : i64, scratch_operands = 0 : i64, tpu.core_type = #tpu.core_type<tc>} {
    %c0 = arith.constant 0 : index
    %c0_0 = arith.constant 0 : index
    %0 = vector.load %arg0[%c0, %c0_0] : memref<128x128xbf16, #tpu.memory_space<vmem>>, vector<128x128xbf16>
    %c0_1 = arith.constant 0 : index
    %c0_2 = arith.constant 0 : index
    %1 = vector.load %arg1[%c0_1, %c0_2] : memref<128x128xbf16, #tpu.memory_space<vmem>>, vector<128x128xbf16>
    %c0_3 = arith.constant 0 : index
    %c0_4 = arith.constant 0 : index
    %2 = vector.load %arg2[%c0_3, %c0_4] : memref<128x128xbf16, #tpu.memory_space<vmem>>, vector<128x128xbf16>
    %c0_5 = arith.constant 0 : index
    %c0_6 = arith.constant 0 : index
    %3 = vector.load %arg3[%c0_5, %c0_6] : memref<1x128xf32, #tpu.memory_space<vmem>>, vector<1x128xf32>
    %cst = arith.constant dense<0.000000e+00> : vector<128x128xf32>
    %4 = tpu.matmul %1, %2, %cst {dimension_numbers = #tpu.dot_dimension_numbers<[1], [0], [0], [1], [0, 0, 1, 1], [], []>} : vector<128x128xbf16>, vector<128x128xbf16>, vector<128x128xf32> -> vector<128x128xf32>
    %5 = arith.truncf %4 : vector<128x128xf32> to vector<128x128xbf16>
    %cst_7 = arith.constant dense<0.000000e+00> : vector<128x128xf32>
    %6 = tpu.matmul %0, %5, %cst_7 {dimension_numbers = #tpu.dot_dimension_numbers<[1], [0], [0], [1], [0, 0, 1, 1], [], []>} : vector<128x128xbf16>, vector<128x128xbf16>, vector<128x128xf32> -> vector<128x128xf32>
    %7 = arith.truncf %6 : vector<128x128xf32> to vector<128x128xbf16>
    %cst_8 = arith.constant dense<0.000000e+00> : vector<128x128xf32>
    %8 = tpu.matmul %0, %7, %cst_8 {dimension_numbers = #tpu.dot_dimension_numbers<[1], [0], [0], [1], [0, 0, 1, 1], [], []>} : vector<128x128xbf16>, vector<128x128xbf16>, vector<128x128xf32> -> vector<128x128xf32>
    %9 = vector.broadcast %3 : vector<1x128xf32> to vector<128x128xf32>
    %10 = arith.addf %8, %9 : vector<128x128xf32>
    %cst_9 = arith.constant 0.000000e+00 : f32
    %11 = vector.broadcast %cst_9 : f32 to vector<128x128xf32>
    %12 = arith.maximumf %10, %11 : vector<128x128xf32>
    %13 = arith.truncf %12 : vector<128x128xf32> to vector<128x128xbf16>
    %c0_10 = arith.constant 0 : index
    %c0_11 = arith.constant 0 : index
    %14 = vector.load %arg4[%c0_10, %c0_11] : memref<128x128xbf16, #tpu.memory_space<vmem>>, vector<128x128xbf16>
    %c0_12 = arith.constant 0 : index
    %c0_13 = arith.constant 0 : index
    %15 = vector.load %arg5[%c0_12, %c0_13] : memref<1x128xf32, #tpu.memory_space<vmem>>, vector<1x128xf32>
    %cst_14 = arith.constant dense<0.000000e+00> : vector<128x128xf32>
    %16 = tpu.matmul %13, %14, %cst_14 {dimension_numbers = #tpu.dot_dimension_numbers<[1], [0], [0], [1], [0, 0, 1, 1], [], []>} : vector<128x128xbf16>, vector<128x128xbf16>, vector<128x128xf32> -> vector<128x128xf32>
    %17 = arith.truncf %16 : vector<128x128xf32> to vector<128x128xbf16>
    %cst_15 = arith.constant dense<0.000000e+00> : vector<128x128xf32>
    %18 = tpu.matmul %0, %17, %cst_15 {dimension_numbers = #tpu.dot_dimension_numbers<[1], [0], [0], [1], [0, 0, 1, 1], [], []>} : vector<128x128xbf16>, vector<128x128xbf16>, vector<128x128xf32> -> vector<128x128xf32>
    %19 = arith.truncf %18 : vector<128x128xf32> to vector<128x128xbf16>
    %cst_16 = arith.constant dense<0.000000e+00> : vector<128x128xf32>
    %20 = tpu.matmul %0, %19, %cst_16 {dimension_numbers = #tpu.dot_dimension_numbers<[1], [0], [0], [1], [0, 0, 1, 1], [], []>} : vector<128x128xbf16>, vector<128x128xbf16>, vector<128x128xf32> -> vector<128x128xf32>
    %21 = vector.broadcast %15 : vector<1x128xf32> to vector<128x128xf32>
    %22 = arith.addf %20, %21 : vector<128x128xf32>
    %c0_17 = arith.constant 0 : index
    %c0_18 = arith.constant 0 : index
    %23 = vector.load %arg6[%c0_17, %c0_18] : memref<128x128xf32, #tpu.memory_space<vmem>>, vector<128x128xf32>
    tpu.vector_store %arg6[%c0_17, %c0_18], %22 {strides = array<i32>} : memref<128x128xf32, #tpu.memory_space<vmem>>, vector<128x128xf32>,
    return
  }
}

</mosaic_0001>

<llo_original>
// kernel: run_sgc.1
$region0: #{run_sgc.1}
  #allocation0 [shape = 'u32[]', space=smem, size = 0x4, offset = 0x4, fixed_abs, tag = 'smem constant byte address 0x4 - core index']
  #allocation1 [shape = 'u32[144,128]{1,0:T(1,128)}', space=vmem, size = 0x12000, scoped, tag = 'internal scratch']
  %s0 = inlined_call_operand.vmem [shape: bf16[128,128], index: 0, kind: input, shape index: {}]
  %s1 = inlined_call_operand.vmem [shape: bf16[128,128], index: 1, kind: input, shape index: {}]
  %s2 = inlined_call_operand.vmem [shape: bf16[128,128], index: 2, kind: input, shape index: {}]
  %s3 = inlined_call_operand.vmem [shape: f32[1,128], index: 3, kind: input, shape index: {}]
  %s4 = inlined_call_operand.vmem [shape: bf16[128,128], index: 4, kind: input, shape index: {}]
  %s5 = inlined_call_operand.vmem [shape: f32[1,128], index: 5, kind: input, shape index: {}]
  %s6 = inlined_call_operand.vmem [shape: f32[128,128], index: 6, kind: output, shape index: {}]
  %s7 = sld [smem:[#allocation0]]
  $region34: #{run_sgc.1} parent=0
    _
  %s9 = ssub.s32 1, %s7
  %s10 = scalar_select 0, %s9, %s7
  // Predicated region
  $region2: #{run_sgc.1} parent=0 // pred_check
    _
  $region3: #{run_sgc.1} parent=0 // pred_check_branch
    %12 = sbr.rel (0) target = $region5
  $region4: #{run_sgc.1} parent=0 // pred_region
    _
  $region5: #{run_sgc.1} parent=0 // pred_fallthru
    _
  // Predicated region
  $region6: #{run_sgc.1} parent=0 // pred_check
    _
  $region7: #{run_sgc.1} parent=0 // pred_check_branch
    %14 = sbr.rel (0) target = $region9
  $region8: #{run_sgc.1} parent=0 // pred_region
    _
  $region9: #{run_sgc.1} parent=0 // pred_fallthru
    _
  // Predicated region
  $region10: #{run_sgc.1} parent=0 // pred_check
    _
  $region11: #{run_sgc.1} parent=0 // pred_check_branch
    %16 = sbr.rel (0) target = $region13
  $region12: #{run_sgc.1} parent=0 // pred_region
    _
  $region13: #{run_sgc.1} parent=0 // pred_fallthru
    _
  // Predicated region
  $region14: #{run_sgc.1} parent=0 // pred_check
    _
  $region15: #{run_sgc.1} parent=0 // pred_check_branch
    %18 = sbr.rel (0) target = $region17
  $region16: #{run_sgc.1} parent=0 // pred_region
    _
  $region17: #{run_sgc.1} parent=0 // pred_fallthru
    _
  // Predicated region
  $region18: #{run_sgc.1} parent=0 // pred_check
    _
  $region19: #{run_sgc.1} parent=0 // pred_check_branch
    %20 = sbr.rel (0) target = $region21
  $region20: #{run_sgc.1} parent=0 // pred_region
    _
  $region21: #{run_sgc.1} parent=0 // pred_fallthru
    _
  // Predicated region
  $region22: #{run_sgc.1} parent=0 // pred_check
    _
  $region23: #{run_sgc.1} parent=0 // pred_check_branch
    %22 = sbr.rel (0) target = $region25
  $region24: #{run_sgc.1} parent=0 // pred_region
    _
  $region25: #{run_sgc.1} parent=0 // pred_fallthru
    _
  %v24 = vld [vmem:[%s0] sm:$0xf]
  %v25 = vld [vmem:[%s0 + $0x4] sm:$0xf]
  %v26 = vld [vmem:[%s0 + $0x8] sm:$0xf]
  %v27 = vld [vmem:[%s0 + $0xc] sm:$0xf]
  %v28 = vld [vmem:[%s0 + $0x10] sm:$0xf]
  %v29 = vld [vmem:[%s0 + $0x14] sm:$0xf]
  %v30 = vld [vmem:[%s0 + $0x18] sm:$0xf]
  %v31 = vld [vmem:[%s0 + $0x1c] sm:$0xf]
  %v32 = vld [vmem:[%s0 + $0x20] sm:$0xf]
  %v33 = vld [vmem:[%s0 + $0x24] sm:$0xf]
  %v34 = vld [vmem:[%s0 + $0x28] sm:$0xf]
  %v35 = vld [vmem:[%s0 + $0x2c] sm:$0xf]
  %v36 = vld [vmem:[%s0 + $0x30] sm:$0xf]
  %v37 = vld [vmem:[%s0 + $0x34] sm:$0xf]
  %v38 = vld [vmem:[%s0 + $0x38] sm:$0xf]
  %v39 = vld [vmem:[%s0 + $0x3c] sm:$0xf]
  %v40 = vld [vmem:[%s1] sm:$0xf]
  %v41 = vld [vmem:[%s1 + $0x4] sm:$0xf]
  %v42 = vld [vmem:[%s1 + $0x8] sm:$0xf]
  %v43 = vld [vmem:[%s1 + $0xc] sm:$0xf]
  %v44 = vld [vmem:[%s1 + $0x10] sm:$0xf]
  %v45 = vld [vmem:[%s1 + $0x14] sm:$0xf]
  %v46 = vld [vmem:[%s1 + $0x18] sm:$0xf]
  %v47 = vld [vmem:[%s1 + $0x1c] sm:$0xf]
  %v48 = vld [vmem:[%s1 + $0x20] sm:$0xf]
  %v49 = vld [vmem:[%s1 + $0x24] sm:$0xf]
  %v50 = vld [vmem:[%s1 + $0x28] sm:$0xf]
  %v51 = vld [vmem:[%s1 + $0x2c] sm:$0xf]
  %v52 = vld [vmem:[%s1 + $0x30] sm:$0xf]
  %v53 = vld [vmem:[%s1 + $0x34] sm:$0xf]
  %v54 = vld [vmem:[%s1 + $0x38] sm:$0xf]
  %v55 = vld [vmem:[%s1 + $0x3c] sm:$0xf]
  %v56 = vld [vmem:[%s2] sm:$0xf]
  %v57 = vld [vmem:[%s2 + $0x4] sm:$0xf]
  %v58 = vld [vmem:[%s2 + $0x8] sm:$0xf]
  %v59 = vld [vmem:[%s2 + $0xc] sm:$0xf]
  %v60 = vld [vmem:[%s2 + $0x10] sm:$0xf]
  %v61 = vld [vmem:[%s2 + $0x14] sm:$0xf]
  %v62 = vld [vmem:[%s2 + $0x18] sm:$0xf]
  %v63 = vld [vmem:[%s2 + $0x1c] sm:$0xf]
  %v64 = vld [vmem:[%s2 + $0x20] sm:$0xf]
  %v65 = vld [vmem:[%s2 + $0x24] sm:$0xf]
  %v66 = vld [vmem:[%s2 + $0x28] sm:$0xf]
  %v67 = vld [vmem:[%s2 + $0x2c] sm:$0xf]
  %v68 = vld [vmem:[%s2 + $0x30] sm:$0xf]
  %v69 = vld [vmem:[%s2 + $0x34] sm:$0xf]
  %v70 = vld [vmem:[%s2 + $0x38] sm:$0xf]
  %v71 = vld [vmem:[%s2 + $0x3c] sm:$0xf]
  %v72 = vld [vmem:[%s3] sm:$0x1]
  %v89 = vunpack.c.l.b16 %v40
  %v90 = vunpack.c.l.b16 %v41
  %v91 = vunpack.c.l.b16 %v42
  %v92 = vunpack.c.l.b16 %v43
  %v93 = vunpack.c.l.b16 %v44
  %v94 = vunpack.c.l.b16 %v45
  %v95 = vunpack.c.l.b16 %v46
  %v96 = vunpack.c.l.b16 %v47
  %v97 = vunpack.c.l.b16 %v48
  %v98 = vunpack.c.l.b16 %v49
  %v99 = vunpack.c.l.b16 %v50
  %v100 = vunpack.c.l.b16 %v51
  %v101 = vunpack.c.l.b16 %v52
  %v102 = vunpack.c.l.b16 %v53
  %v103 = vunpack.c.l.b16 %v54
  %v104 = vunpack.c.l.b16 %v55
  %v105 = vpack.c.b16 %v90, %v89
  %v106 = vpack.c.b16 %v92, %v91
  %v107 = vpack.c.b16 %v94, %v93
  %v108 = vpack.c.b16 %v96, %v95
  %v109 = vpack.c.b16 %v98, %v97
  %v110 = vpack.c.b16 %v100, %v99
  %v111 = vpack.c.b16 %v102, %v101
  %v112 = vpack.c.b16 %v104, %v103
  %v137 = vunpack.c.l.b16 %v56
  %v138 = vunpack.c.l.b16 %v57
  %v139 = vunpack.c.l.b16 %v58
  %v140 = vunpack.c.l.b16 %v59
  %v141 = vunpack.c.l.b16 %v60
  %v142 = vunpack.c.l.b16 %v61
  %v143 = vunpack.c.l.b16 %v62
  %v144 = vunpack.c.l.b16 %v63
  %v145 = vunpack.c.l.b16 %v64
  %v146 = vunpack.c.l.b16 %v65
  %v147 = vunpack.c.l.b16 %v66
  %v148 = vunpack.c.l.b16 %v67
  %v149 = vunpack.c.l.b16 %v68
  %v150 = vunpack.c.l.b16 %v69
  %v151 = vunpack.c.l.b16 %v70
  %v152 = vunpack.c.l.b16 %v71
  %v153 = vpack.c.b16 %v138, %v137
  %v154 = vpack.c.b16 %v140, %v139
  %v155 = vpack.c.b16 %v142, %v141
  %v156 = vpack.c.b16 %v144, %v143
  %v157 = vpack.c.b16 %v146, %v145
  %v158 = vpack.c.b16 %v148, %v147
  %v159 = vpack.c.b16 %v150, %v149
  %v160 = vpack.c.b16 %v152, %v151
  %169 = vmatprep.subr.bf16.mxu0 0
  %170 = vmatpush1.bf16.msra.mxu0 %v153
  %171 = vmatprep.subr.bf16.mxu0 0
  %172 = vmatpush1.bf16.msra.mxu0 %v154
  %173 = vmatprep.subr.bf16.mxu0 0
  %174 = vmatpush1.bf16.msra.mxu0 %v155
  %175 = vmatprep.subr.bf16.mxu0 0
  %176 = vmatpush1.bf16.msra.mxu0 %v156
  %177 = vmatprep.subr.bf16.mxu0 0
  %178 = vmatpush1.bf16.msra.mxu0 %v157
  %179 = vmatprep.subr.bf16.mxu0 0
  %180 = vmatpush1.bf16.msra.mxu0 %v158
  %181 = vmatprep.subr.bf16.mxu0 0
  %182 = vmatpush1.bf16.msra.mxu0 %v159
  %183 = vmatprep.subr.bf16.mxu0 0
  %184 = vmatpush1.bf16.msra.mxu0 %v160
  %185 = vmatprep.subr.bf16.mxu0 0
  %186 = vmatpush1.bf16.msra.mxu0 0
  %187 = vmatprep.subr.bf16.mxu0 0
  %188 = vmatpush1.bf16.msra.mxu0 0
  %189 = vmatprep.subr.bf16.mxu0 0
  %190 = vmatpush1.bf16.msra.mxu0 0
  %191 = vmatprep.subr.bf16.mxu0 0
  %192 = vmatpush1.bf16.msra.mxu0 0
  %193 = vmatprep.subr.bf16.mxu0 0
  %194 = vmatpush1.bf16.msra.mxu0 0
  %195 = vmatprep.subr.bf16.mxu0 0
  %196 = vmatpush1.bf16.msra.mxu0 0
  %197 = vmatprep.subr.bf16.mxu0 0
  %198 = vmatpush1.bf16.msra.mxu0 0
  %199 = vmatprep.subr.bf16.mxu0 0
  %200 = vmatpush1.bf16.msra.mxu0 0
  %201 = vmatprep.mubr.bf16.mxu0 0
  %202 = vmatmul.mubr.bf16.gmra.mrb[0].mxu0 %v105
  %v203 = vpop.f32.mrb[0].mxu0
  %v204 = vadd.f32 0.0, %v203
  %v205 = vpop.f32.mrb[0].mxu0
  %v206 = vpop.f32.mrb[0].mxu0
  %v207 = vadd.f32 0.0, %v206
  %v208 = vpop.f32.mrb[0].mxu0
  %209 = vmatprep.mubr.bf16.mxu0 0
  %210 = vmatmul.mubr.bf16.gmra.mrb[0].mxu0 %v106
  %v211 = vpop.f32.mrb[0].mxu0
  %v212 = vadd.f32 0.0, %v211
  %v213 = vpop.f32.mrb[0].mxu0
  %v214 = vpop.f32.mrb[0].mxu0
  %v215 = vadd.f32 0.0, %v214
  %v216 = vpop.f32.mrb[0].mxu0
  %217 = vmatprep.mubr.bf16.mxu0 0
  %218 = vmatmul.mubr.bf16.gmra.mrb[0].mxu0 %v107
  %v219 = vpop.f32.mrb[0].mxu0
  %v220 = vadd.f32 0.0, %v219
  %v221 = vpop.f32.mrb[0].mxu0
  %v222 = vpop.f32.mrb[0].mxu0
  %v223 = vadd.f32 0.0, %v222
  %v224 = vpop.f32.mrb[0].mxu0
  %225 = vmatprep.mubr.bf16.mxu0 0
  %226 = vmatmul.mubr.bf16.gmra.mrb[0].mxu0 %v108
  %v227 = vpop.f32.mrb[0].mxu0
  %v228 = vadd.f32 0.0, %v227
  %v229 = vpop.f32.mrb[0].mxu0
  %v230 = vpop.f32.mrb[0].mxu0
  %v231 = vadd.f32 0.0, %v230
  %v232 = vpop.f32.mrb[0].mxu0
  %233 = vmatprep.mubr.bf16.mxu0 0
  %234 = vmatmul.mubr.bf16.gmra.mrb[0].mxu0 %v109
  %v235 = vpop.f32.mrb[0].mxu0
  %v236 = vadd.f32 0.0, %v235
  %v237 = vpop.f32.mrb[0].mxu0
  %v238 = vpop.f32.mrb[0].mxu0
  %v239 = vadd.f32 0.0, %v238
  %v240 = vpop.f32.mrb[0].mxu0
  %241 = vmatprep.mubr.bf16.mxu0 0
  %242 = vmatmul.mubr.bf16.gmra.mrb[0].mxu0 %v110
  %v243 = vpop.f32.mrb[0].mxu0
  %v244 = vadd.f32 0.0, %v243
  %v245 = vpop.f32.mrb[0].mxu0
  %v246 = vpop.f32.mrb[0].mxu0
  %v247 = vadd.f32 0.0, %v246
  %v248 = vpop.f32.mrb[0].mxu0
  %249 = vmatprep.mubr.bf16.mxu0 0
  %250 = vmatmul.mubr.bf16.gmra.mrb[0].mxu0 %v111
  %v251 = vpop.f32.mrb[0].mxu0
  %v252 = vadd.f32 0.0, %v251
  %v253 = vpop.f32.mrb[0].mxu0
  %v254 = vpop.f32.mrb[0].mxu0
  %v255 = vadd.f32 0.0, %v254
  %v256 = vpop.f32.mrb[0].mxu0
  %257 = vmatprep.mubr.bf16.mxu0 0
  %258 = vmatmul.mubr.bf16.gmra.mrb[0].mxu0 %v112
  %v259 = vpop.f32.mrb[0].mxu0
  %v260 = vadd.f32 0.0, %v259
  %v261 = vpop.f32.mrb[0].mxu0
  %v262 = vpop.f32.mrb[0].mxu0
  %v263 = vadd.f32 0.0, %v262
  %v264 = vpop.f32.mrb[0].mxu0
  %265 = vdwg.mxu0
  %v266 = vpack.c.bf16 %v207, %v204
  %v267 = vpack.c.bf16 %v215, %v212
  %v268 = vpack.c.bf16 %v223, %v220
  %v269 = vpack.c.bf16 %v231, %v228
  %v270 = vpack.c.bf16 %v239, %v236
  %v271 = vpack.c.bf16 %v247, %v244
  %v272 = vpack.c.bf16 %v255, %v252
  %v273 = vpack.c.bf16 %v263, %v260
  %v290 = vunpack.c.l.b16 %v24
  %v291 = vunpack.c.l.b16 %v25
  %v292 = vunpack.c.l.b16 %v26
  %v293 = vunpack.c.l.b16 %v27
  %v294 = vunpack.c.l.b16 %v28
  %v295 = vunpack.c.l.b16 %v29
  %v296 = vunpack.c.l.b16 %v30
  %v297 = vunpack.c.l.b16 %v31
  %v298 = vunpack.c.l.b16 %v32
  %v299 = vunpack.c.l.b16 %v33
  %v300 = vunpack.c.l.b16 %v34
  %v301 = vunpack.c.l.b16 %v35
  %v302 = vunpack.c.l.b16 %v36
  %v303 = vunpack.c.l.b16 %v37
  %v304 = vunpack.c.l.b16 %v38
  %v305 = vunpack.c.l.b16 %v39
  %v306 = vpack.c.b16 %v291, %v290
  %v307 = vpack.c.b16 %v293, %v292
  %v308 = vpack.c.b16 %v295, %v294
  %v309 = vpack.c.b16 %v297, %v296
  %v310 = vpack.c.b16 %v299, %v298
  %v311 = vpack.c.b16 %v301, %v300
  %v312 = vpack.c.b16 %v303, %v302
  %v313 = vpack.c.b16 %v305, %v304
  %322 = vmatprep.subr.bf16.mxu0 0
  %323 = vmatpush1.bf16.msra.mxu0 %v266
  %324 = vmatprep.subr.bf16.mxu0 0
  %325 = vmatpush1.bf16.msra.mxu0 %v267
  %326 = vmatprep.subr.bf16.mxu0 0
  %327 = vmatpush1.bf16.msra.mxu0 %v268
  %328 = vmatprep.subr.bf16.mxu0 0
  %329 = vmatpush1.bf16.msra.mxu0 %v269
  %330 = vmatprep.subr.bf16.mxu0 0
  %331 = vmatpush1.bf16.msra.mxu0 %v270
  %332 = vmatprep.subr.bf16.mxu0 0
  %333 = vmatpush1.bf16.msra.mxu0 %v271
  %334 = vmatprep.subr.bf16.mxu0 0
  %335 = vmatpush1.bf16.msra.mxu0 %v272
  %336 = vmatprep.subr.bf16.mxu0 0
  %337 = vmatpush1.bf16.msra.mxu0 %v273
  %338 = vmatprep.subr.bf16.mxu0 0
  %339 = vmatpush1.bf16.msra.mxu0 0
  %340 = vmatprep.subr.bf16.mxu0 0
  %341 = vmatpush1.bf16.msra.mxu0 0
  %342 = vmatprep.subr.bf16.mxu0 0
  %343 = vmatpush1.bf16.msra.mxu0 0
  %344 = vmatprep.subr.bf16.mxu0 0
  %345 = vmatpush1.bf16.msra.mxu0 0
  %346 = vmatprep.subr.bf16.mxu0 0
  %347 = vmatpush1.bf16.msra.mxu0 0
  %348 = vmatprep.subr.bf16.mxu0 0
  %349 = vmatpush1.bf16.msra.mxu0 0
  %350 = vmatprep.subr.bf16.mxu0 0
  %351 = vmatpush1.bf16.msra.mxu0 0
  %352 = vmatprep.subr.bf16.mxu0 0
  %353 = vmatpush1.bf16.msra.mxu0 0
  %354 = vmatprep.mubr.bf16.mxu0 0
  %355 = vmatmul.mubr.bf16.gmra.mrb[0].mxu0 %v306
  %v356 = vpop.f32.mrb[0].mxu0
  %v357 = vadd.f32 0.0, %v356
  %v358 = vpop.f32.mrb[0].mxu0
  %v359 = vpop.f32.mrb[0].mxu0
  %v360 = vadd.f32 0.0, %v359
  %v361 = vpop.f32.mrb[0].mxu0
  %362 = vmatprep.mubr.bf16.mxu0 0
  %363 = vmatmul.mubr.bf16.gmra.mrb[0].mxu0 %v307
  %v364 = vpop.f32.mrb[0].mxu0
  %v365 = vadd.f32 0.0, %v364
  %v366 = vpop.f32.mrb[0].mxu0
  %v367 = vpop.f32.mrb[0].mxu0
  %v368 = vadd.f32 0.0, %v367
  %v369 = vpop.f32.mrb[0].mxu0
  %370 = vmatprep.mubr.bf16.mxu0 0
  %371 = vmatmul.mubr.bf16.gmra.mrb[0].mxu0 %v308
  %v372 = vpop.f32.mrb[0].mxu0
  %v373 = vadd.f32 0.0, %v372
  %v374 = vpop.f32.mrb[0].mxu0
  %v375 = vpop.f32.mrb[0].mxu0
  %v376 = vadd.f32 0.0, %v375
  %v377 = vpop.f32.mrb[0].mxu0
  %378 = vmatprep.mubr.bf16.mxu0 0
  %379 = vmatmul.mubr.bf16.gmra.mrb[0].mxu0 %v309
  %v380 = vpop.f32.mrb[0].mxu0
  %v381 = vadd.f32 0.0, %v380
  %v382 = vpop.f32.mrb[0].mxu0
  %v383 = vpop.f32.mrb[0].mxu0
  %v384 = vadd.f32 0.0, %v383
  %v385 = vpop.f32.mrb[0].mxu0
  %386 = vmatprep.mubr.bf16.mxu0 0
  %387 = vmatmul.mubr.bf16.gmra.mrb[0].mxu0 %v310
  %v388 = vpop.f32.mrb[0].mxu0
  %v389 = vadd.f32 0.0, %v388
  %v390 = vpop.f32.mrb[0].mxu0
  %v391 = vpop.f32.mrb[0].mxu0
  %v392 = vadd.f32 0.0, %v391
  %v393 = vpop.f32.mrb[0].mxu0
  %394 = vmatprep.mubr.bf16.mxu0 0
  %395 = vmatmul.mubr.bf16.gmra.mrb[0].mxu0 %v311
  %v396 = vpop.f32.mrb[0].mxu0
  %v397 = vadd.f32 0.0, %v396
  %v398 = vpop.f32.mrb[0].mxu0
  %v399 = vpop.f32.mrb[0].mxu0
  %v400 = vadd.f32 0.0, %v399
  %v401 = vpop.f32.mrb[0].mxu0
  %402 = vmatprep.mubr.bf16.mxu0 0
  %403 = vmatmul.mubr.bf16.gmra.mrb[0].mxu0 %v312
  %v404 = vpop.f32.mrb[0].mxu0
  %v405 = vadd.f32 0.0, %v404
  %v406 = vpop.f32.mrb[0].mxu0
  %v407 = vpop.f32.mrb[0].mxu0
  %v408 = vadd.f32 0.0, %v407
  %v409 = vpop.f32.mrb[0].mxu0
  %410 = vmatprep.mubr.bf16.mxu0 0
  %411 = vmatmul.mubr.bf16.gmra.mrb[0].mxu0 %v313
  %v412 = vpop.f32.mrb[0].mxu0
  %v413 = vadd.f32 0.0, %v412
  %v414 = vpop.f32.mrb[0].mxu0
  %v415 = vpop.f32.mrb[0].mxu0
  %v416 = vadd.f32 0.0, %v415
  %v417 = vpop.f32.mrb[0].mxu0
  %418 = vdwg.mxu0
  %v419 = vpack.c.bf16 %v360, %v357
  %v420 = vpack.c.bf16 %v368, %v365
  %v421 = vpack.c.bf16 %v376, %v373
  %v422 = vpack.c.bf16 %v384, %v381
  %v423 = vpack.c.bf16 %v392, %v389
  %v424 = vpack.c.bf16 %v400, %v397
  %v425 = vpack.c.bf16 %v408, %v405
  %v426 = vpack.c.bf16 %v416, %v413
  %v428 = vlaneseq
  %v429 = vshrl.u32 %v428, 7
  %v430 = vsub.s32 0, %v429
  %v431 = vrot.slane %v72, %v430
  %433 = vmatprep.subr.bf16.mxu0 0
  %434 = vmatpush1.bf16.msra.mxu0 %v419
  %435 = vmatprep.subr.bf16.mxu0 0
  %436 = vmatpush1.bf16.msra.mxu0 %v420
  %437 = vmatprep.subr.bf16.mxu0 0
  %438 = vmatpush1.bf16.msra.mxu0 %v421
  %439 = vmatprep.subr.bf16.mxu0 0
  %440 = vmatpush1.bf16.msra.mxu0 %v422
  %441 = vmatprep.subr.bf16.mxu0 0
  %442 = vmatpush1.bf16.msra.mxu0 %v423
  %443 = vmatprep.subr.bf16.mxu0 0
  %444 = vmatpush1.bf16.msra.mxu0 %v424
  %445 = vmatprep.subr.bf16.mxu0 0
  %446 = vmatpush1.bf16.msra.mxu0 %v425
  %447 = vmatprep.subr.bf16.mxu0 0
  %448 = vmatpush1.bf16.msra.mxu0 %v426
  %449 = vmatprep.subr.bf16.mxu0 0
  %450 = vmatpush1.bf16.msra.mxu0 0
  %451 = vmatprep.subr.bf16.mxu0 0
  %452 = vmatpush1.bf16.msra.mxu0 0
  %453 = vmatprep.subr.bf16.mxu0 0
  %454 = vmatpush1.bf16.msra.mxu0 0
  %455 = vmatprep.subr.bf16.mxu0 0
  %456 = vmatpush1.bf16.msra.mxu0 0
  %457 = vmatprep.subr.bf16.mxu0 0
  %458 = vmatpush1.bf16.msra.mxu0 0
  %459 = vmatprep.subr.bf16.mxu0 0
  %460 = vmatpush1.bf16.msra.mxu0 0
  %461 = vmatprep.subr.bf16.mxu0 0
  %462 = vmatpush1.bf16.msra.mxu0 0
  %463 = vmatprep.subr.bf16.mxu0 0
  %464 = vmatpush1.bf16.msra.mxu0 0
  %465 = vmatprep.mubr.bf16.mxu0 0
  %466 = vmatmul.mubr.bf16.gmra.mrb[0].mxu0 %v306
  %v467 = vpop.f32.mrb[0].mxu0
  %v468 = vadd.f32 %v431, %v467
  %v469 = vpop.f32.mrb[0].mxu0
  %v470 = vpop.f32.mrb[0].mxu0
  %v471 = vadd.f32 %v431, %v470
  %v472 = vpop.f32.mrb[0].mxu0
  %473 = vmatprep.mubr.bf16.mxu0 0
  %474 = vmatmul.mubr.bf16.gmra.mrb[0].mxu0 %v307
  %v475 = vpop.f32.mrb[0].mxu0
  %v476 = vadd.f32 %v431, %v475
  %v477 = vpop.f32.mrb[0].mxu0
  %v478 = vpop.f32.mrb[0].mxu0
  %v479 = vadd.f32 %v431, %v478
  %v480 = vpop.f32.mrb[0].mxu0
  %481 = vmatprep.mubr.bf16.mxu0 0
  %482 = vmatmul.mubr.bf16.gmra.mrb[0].mxu0 %v308
  %v483 = vpop.f32.mrb[0].mxu0
  %v484 = vadd.f32 %v431, %v483
  %v485 = vpop.f32.mrb[0].mxu0
  %v486 = vpop.f32.mrb[0].mxu0
  %v487 = vadd.f32 %v431, %v486
  %v488 = vpop.f32.mrb[0].mxu0
  %489 = vmatprep.mubr.bf16.mxu0 0
  %490 = vmatmul.mubr.bf16.gmra.mrb[0].mxu0 %v309
  %v491 = vpop.f32.mrb[0].mxu0
  %v492 = vadd.f32 %v431, %v491
  %v493 = vpop.f32.mrb[0].mxu0
  %v494 = vpop.f32.mrb[0].mxu0
  %v495 = vadd.f32 %v431, %v494
  %v496 = vpop.f32.mrb[0].mxu0
  %497 = vmatprep.mubr.bf16.mxu0 0
  %498 = vmatmul.mubr.bf16.gmra.mrb[0].mxu0 %v310
  %v499 = vpop.f32.mrb[0].mxu0
  %v500 = vadd.f32 %v431, %v499
  %v501 = vpop.f32.mrb[0].mxu0
  %v502 = vpop.f32.mrb[0].mxu0
  %v503 = vadd.f32 %v431, %v502
  %v504 = vpop.f32.mrb[0].mxu0
  %505 = vmatprep.mubr.bf16.mxu0 0
  %506 = vmatmul.mubr.bf16.gmra.mrb[0].mxu0 %v311
  %v507 = vpop.f32.mrb[0].mxu0
  %v508 = vadd.f32 %v431, %v507
  %v509 = vpop.f32.mrb[0].mxu0
  %v510 = vpop.f32.mrb[0].mxu0
  %v511 = vadd.f32 %v431, %v510
  %v512 = vpop.f32.mrb[0].mxu0
  %513 = vmatprep.mubr.bf16.mxu0 0
  %514 = vmatmul.mubr.bf16.gmra.mrb[0].mxu0 %v312
  %v515 = vpop.f32.mrb[0].mxu0
  %v516 = vadd.f32 %v431, %v515
  %v517 = vpop.f32.mrb[0].mxu0
  %v518 = vpop.f32.mrb[0].mxu0
  %v519 = vadd.f32 %v431, %v518
  %v520 = vpop.f32.mrb[0].mxu0
  %521 = vmatprep.mubr.bf16.mxu0 0
  %522 = vmatmul.mubr.bf16.gmra.mrb[0].mxu0 %v313
  %v523 = vpop.f32.mrb[0].mxu0
  %v524 = vadd.f32 %v431, %v523
  %v525 = vpop.f32.mrb[0].mxu0
  %v526 = vpop.f32.mrb[0].mxu0
  %v527 = vadd.f32 %v431, %v526
  %v528 = vpop.f32.mrb[0].mxu0
  %529 = vdwg.mxu0
  %v530 = vmax.f32 %v468, 0.0
  %v531 = vmax.f32 %v471, 0.0
  %v532 = vmax.f32 %v476, 0.0
  %v533 = vmax.f32 %v479, 0.0
  %v534 = vmax.f32 %v484, 0.0
  %v535 = vmax.f32 %v487, 0.0
  %v536 = vmax.f32 %v492, 0.0
  %v537 = vmax.f32 %v495, 0.0
  %v538 = vmax.f32 %v500, 0.0
  %v539 = vmax.f32 %v503, 0.0
  %v540 = vmax.f32 %v508, 0.0
  %v541 = vmax.f32 %v511, 0.0
  %v542 = vmax.f32 %v516, 0.0
  %v543 = vmax.f32 %v519, 0.0
  %v544 = vmax.f32 %v524, 0.0
  %v545 = vmax.f32 %v527, 0.0
  %v546 = vpack.c.bf16 %v531, %v530
  %v547 = vpack.c.bf16 %v533, %v532
  %v548 = vpack.c.bf16 %v535, %v534
  %v549 = vpack.c.bf16 %v537, %v536
  %v550 = vpack.c.bf16 %v539, %v538
  %v551 = vpack.c.bf16 %v541, %v540
  %v552 = vpack.c.bf16 %v543, %v542
  %v553 = vpack.c.bf16 %v545, %v544
  %v554 = vld [vmem:[%s4] sm:$0xf]
  %v555 = vld [vmem:[%s4 + $0x4] sm:$0xf]
  %v556 = vld [vmem:[%s4 + $0x8] sm:$0xf]
  %v557 = vld [vmem:[%s4 + $0xc] sm:$0xf]
  %v558 = vld [vmem:[%s4 + $0x10] sm:$0xf]
  %v559 = vld [vmem:[%s4 + $0x14] sm:$0xf]
  %v560 = vld [vmem:[%s4 + $0x18] sm:$0xf]
  %v561 = vld [vmem:[%s4 + $0x1c] sm:$0xf]
  %v562 = vld [vmem:[%s4 + $0x20] sm:$0xf]
  %v563 = vld [vmem:[%s4 + $0x24] sm:$0xf]
  %v564 = vld [vmem:[%s4 + $0x28] sm:$0xf]
  %v565 = vld [vmem:[%s4 + $0x2c] sm:$0xf]
  %v566 = vld [vmem:[%s4 + $0x30] sm:$0xf]
  %v567 = vld [vmem:[%s4 + $0x34] sm:$0xf]
  %v568 = vld [vmem:[%s4 + $0x38] sm:$0xf]
  %v569 = vld [vmem:[%s4 + $0x3c] sm:$0xf]
  %v570 = vld [vmem:[%s5] sm:$0x1]
  %v587 = vunpack.c.l.b16 %v554
  %v588 = vunpack.c.l.b16 %v555
  %v589 = vunpack.c.l.b16 %v556
  %v590 = vunpack.c.l.b16 %v557
  %v591 = vunpack.c.l.b16 %v558
  %v592 = vunpack.c.l.b16 %v559
  %v593 = vunpack.c.l.b16 %v560
  %v594 = vunpack.c.l.b16 %v561
  %v595 = vunpack.c.l.b16 %v562
  %v596 = vunpack.c.l.b16 %v563
  %v597 = vunpack.c.l.b16 %v564
  %v598 = vunpack.c.l.b16 %v565
  %v599 = vunpack.c.l.b16 %v566
  %v600 = vunpack.c.l.b16 %v567
  %v601 = vunpack.c.l.b16 %v568
  %v602 = vunpack.c.l.b16 %v569
  %v603 = vpack.c.b16 %v588, %v587
  %v604 = vpack.c.b16 %v590, %v589
  %v605 = vpack.c.b16 %v592, %v591
  %v606 = vpack.c.b16 %v594, %v593
  %v607 = vpack.c.b16 %v596, %v595
  %v608 = vpack.c.b16 %v598, %v597
  %v609 = vpack.c.b16 %v600, %v599
  %v610 = vpack.c.b16 %v602, %v601
  %619 = vmatprep.subr.bf16.mxu0 0
  %620 = vmatpush1.bf16.msra.mxu0 %v603
  %621 = vmatprep.subr.bf16.mxu0 0
  %622 = vmatpush1.bf16.msra.mxu0 %v604
  %623 = vmatprep.subr.bf16.mxu0 0
  %624 = vmatpush1.bf16.msra.mxu0 %v605
  %625 = vmatprep.subr.bf16.mxu0 0
  %626 = vmatpush1.bf16.msra.mxu0 %v606
  %627 = vmatprep.subr.bf16.mxu0 0
  %628 = vmatpush1.bf16.msra.mxu0 %v607
  %629 = vmatprep.subr.bf16.mxu0 0
  %630 = vmatpush1.bf16.msra.mxu0 %v608
  %631 = vmatprep.subr.bf16.mxu0 0
  %632 = vmatpush1.bf16.msra.mxu0 %v609
  %633 = vmatprep.subr.bf16.mxu0 0
  %634 = vmatpush1.bf16.msra.mxu0 %v610
  %635 = vmatprep.subr.bf16.mxu0 0
  %636 = vmatpush1.bf16.msra.mxu0 0
  %637 = vmatprep.subr.bf16.mxu0 0
  %638 = vmatpush1.bf16.msra.mxu0 0
  %639 = vmatprep.subr.bf16.mxu0 0
  %640 = vmatpush1.bf16.msra.mxu0 0
  %641 = vmatprep.subr.bf16.mxu0 0
  %642 = vmatpush1.bf16.msra.mxu0 0
  %643 = vmatprep.subr.bf16.mxu0 0
  %644 = vmatpush1.bf16.msra.mxu0 0
  %645 = vmatprep.subr.bf16.mxu0 0
  %646 = vmatpush1.bf16.msra.mxu0 0
  %647 = vmatprep.subr.bf16.mxu0 0
  %648 = vmatpush1.bf16.msra.mxu0 0
  %649 = vmatprep.subr.bf16.mxu0 0
  %650 = vmatpush1.bf16.msra.mxu0 0
  %651 = vmatprep.mubr.bf16.mxu0 0
  %652 = vmatmul.mubr.bf16.gmra.mrb[0].mxu0 %v546
  %v653 = vpop.f32.mrb[0].mxu0
  %v654 = vadd.f32 0.0, %v653
  %v655 = vpop.f32.mrb[0].mxu0
  %v656 = vpop.f32.mrb[0].mxu0
  %v657 = vadd.f32 0.0, %v656
  %v658 = vpop.f32.mrb[0].mxu0
  %659 = vmatprep.mubr.bf16.mxu0 0
  %660 = vmatmul.mubr.bf16.gmra.mrb[0].mxu0 %v547
  %v661 = vpop.f32.mrb[0].mxu0
  %v662 = vadd.f32 0.0, %v661
  %v663 = vpop.f32.mrb[0].mxu0
  %v664 = vpop.f32.mrb[0].mxu0
  %v665 = vadd.f32 0.0, %v664
  %v666 = vpop.f32.mrb[0].mxu0
  %667 = vmatprep.mubr.bf16.mxu0 0
  %668 = vmatmul.mubr.bf16.gmra.mrb[0].mxu0 %v548
  %v669 = vpop.f32.mrb[0].mxu0
  %v670 = vadd.f32 0.0, %v669
  %v671 = vpop.f32.mrb[0].mxu0
  %v672 = vpop.f32.mrb[0].mxu0
  %v673 = vadd.f32 0.0, %v672
  %v674 = vpop.f32.mrb[0].mxu0
  %675 = vmatprep.mubr.bf16.mxu0 0
  %676 = vmatmul.mubr.bf16.gmra.mrb[0].mxu0 %v549
  %v677 = vpop.f32.mrb[0].mxu0
  %v678 = vadd.f32 0.0, %v677
  %v679 = vpop.f32.mrb[0].mxu0
  %v680 = vpop.f32.mrb[0].mxu0
  %v681 = vadd.f32 0.0, %v680
  %v682 = vpop.f32.mrb[0].mxu0
  %683 = vmatprep.mubr.bf16.mxu0 0
  %684 = vmatmul.mubr.bf16.gmra.mrb[0].mxu0 %v550
  %v685 = vpop.f32.mrb[0].mxu0
  %v686 = vadd.f32 0.0, %v685
  %v687 = vpop.f32.mrb[0].mxu0
  %v688 = vpop.f32.mrb[0].mxu0
  %v689 = vadd.f32 0.0, %v688
  %v690 = vpop.f32.mrb[0].mxu0
  %691 = vmatprep.mubr.bf16.mxu0 0
  %692 = vmatmul.mubr.bf16.gmra.mrb[0].mxu0 %v551
  %v693 = vpop.f32.mrb[0].mxu0
  %v694 = vadd.f32 0.0, %v693
  %v695 = vpop.f32.mrb[0].mxu0
  %v696 = vpop.f32.mrb[0].mxu0
  %v697 = vadd.f32 0.0, %v696
  %v698 = vpop.f32.mrb[0].mxu0
  %699 = vmatprep.mubr.bf16.mxu0 0
  %700 = vmatmul.mubr.bf16.gmra.mrb[0].mxu0 %v552
  %v701 = vpop.f32.mrb[0].mxu0
  %v702 = vadd.f32 0.0, %v701
  %v703 = vpop.f32.mrb[0].mxu0
  %v704 = vpop.f32.mrb[0].mxu0
  %v705 = vadd.f32 0.0, %v704
  %v706 = vpop.f32.mrb[0].mxu0
  %707 = vmatprep.mubr.bf16.mxu0 0
  %708 = vmatmul.mubr.bf16.gmra.mrb[0].mxu0 %v553
  %v709 = vpop.f32.mrb[0].mxu0
  %v710 = vadd.f32 0.0, %v709
  %v711 = vpop.f32.mrb[0].mxu0
  %v712 = vpop.f32.mrb[0].mxu0
  %v713 = vadd.f32 0.0, %v712
  %v714 = vpop.f32.mrb[0].mxu0
  %715 = vdwg.mxu0
  %v716 = vpack.c.bf16 %v657, %v654
  %v717 = vpack.c.bf16 %v665, %v662
  %v718 = vpack.c.bf16 %v673, %v670
  %v719 = vpack.c.bf16 %v681, %v678
  %v720 = vpack.c.bf16 %v689, %v686
  %v721 = vpack.c.bf16 %v697, %v694
  %v722 = vpack.c.bf16 %v705, %v702
  %v723 = vpack.c.bf16 %v713, %v710
  %724 = vmatprep.subr.bf16.mxu0 0
  %725 = vmatpush1.bf16.msra.mxu0 %v716
  %726 = vmatprep.subr.bf16.mxu0 0
  %727 = vmatpush1.bf16.msra.mxu0 %v717
  %728 = vmatprep.subr.bf16.mxu0 0
  %729 = vmatpush1.bf16.msra.mxu0 %v718
  %730 = vmatprep.subr.bf16.mxu0 0
  %731 = vmatpush1.bf16.msra.mxu0 %v719
  %732 = vmatprep.subr.bf16.mxu0 0
  %733 = vmatpush1.bf16.msra.mxu0 %v720
  %734 = vmatprep.subr.bf16.mxu0 0
  %735 = vmatpush1.bf16.msra.mxu0 %v721
  %736 = vmatprep.subr.bf16.mxu0 0
  %737 = vmatpush1.bf16.msra.mxu0 %v722
  %738 = vmatprep.subr.bf16.mxu0 0
  %739 = vmatpush1.bf16.msra.mxu0 %v723
  %740 = vmatprep.subr.bf16.mxu0 0
  %741 = vmatpush1.bf16.msra.mxu0 0
  %742 = vmatprep.subr.bf16.mxu0 0
  %743 = vmatpush1.bf16.msra.mxu0 0
  %744 = vmatprep.subr.bf16.mxu0 0
  %745 = vmatpush1.bf16.msra.mxu0 0
  %746 = vmatprep.subr.bf16.mxu0 0
  %747 = vmatpush1.bf16.msra.mxu0 0
  %748 = vmatprep.subr.bf16.mxu0 0
  %749 = vmatpush1.bf16.msra.mxu0 0
  %750 = vmatprep.subr.bf16.mxu0 0
  %751 = vmatpush1.bf16.msra.mxu0 0
  %752 = vmatprep.subr.bf16.mxu0 0
  %753 = vmatpush1.bf16.msra.mxu0 0
  %754 = vmatprep.subr.bf16.mxu0 0
  %755 = vmatpush1.bf16.msra.mxu0 0
  %756 = vmatprep.mubr.bf16.mxu0 0
  %757 = vmatmul.mubr.bf16.gmra.mrb[0].mxu0 %v306
  %v758 = vpop.f32.mrb[0].mxu0
  %v759 = vadd.f32 0.0, %v758
  %v760 = vpop.f32.mrb[0].mxu0
  %v761 = vpop.f32.mrb[0].mxu0
  %v762 = vadd.f32 0.0, %v761
  %v763 = vpop.f32.mrb[0].mxu0
  %764 = vmatprep.mubr.bf16.mxu0 0
  %765 = vmatmul.mubr.bf16.gmra.mrb[0].mxu0 %v307
  %v766 = vpop.f32.mrb[0].mxu0
  %v767 = vadd.f32 0.0, %v766
  %v768 = vpop.f32.mrb[0].mxu0
  %v769 = vpop.f32.mrb[0].mxu0
  %v770 = vadd.f32 0.0, %v769
  %v771 = vpop.f32.mrb[0].mxu0
  %772 = vmatprep.mubr.bf16.mxu0 0
  %773 = vmatmul.mubr.bf16.gmra.mrb[0].mxu0 %v308
  %v774 = vpop.f32.mrb[0].mxu0
  %v775 = vadd.f32 0.0, %v774
  %v776 = vpop.f32.mrb[0].mxu0
  %v777 = vpop.f32.mrb[0].mxu0
  %v778 = vadd.f32 0.0, %v777
  %v779 = vpop.f32.mrb[0].mxu0
  %780 = vmatprep.mubr.bf16.mxu0 0
  %781 = vmatmul.mubr.bf16.gmra.mrb[0].mxu0 %v309
  %v782 = vpop.f32.mrb[0].mxu0
  %v783 = vadd.f32 0.0, %v782
  %v784 = vpop.f32.mrb[0].mxu0
  %v785 = vpop.f32.mrb[0].mxu0
  %v786 = vadd.f32 0.0, %v785
  %v787 = vpop.f32.mrb[0].mxu0
  %788 = vmatprep.mubr.bf16.mxu0 0
  %789 = vmatmul.mubr.bf16.gmra.mrb[0].mxu0 %v310
  %v790 = vpop.f32.mrb[0].mxu0
  %v791 = vadd.f32 0.0, %v790
  %v792 = vpop.f32.mrb[0].mxu0
  %v793 = vpop.f32.mrb[0].mxu0
  %v794 = vadd.f32 0.0, %v793
  %v795 = vpop.f32.mrb[0].mxu0
  %796 = vmatprep.mubr.bf16.mxu0 0
  %797 = vmatmul.mubr.bf16.gmra.mrb[0].mxu0 %v311
  %v798 = vpop.f32.mrb[0].mxu0
  %v799 = vadd.f32 0.0, %v798
  %v800 = vpop.f32.mrb[0].mxu0
  %v801 = vpop.f32.mrb[0].mxu0
  %v802 = vadd.f32 0.0, %v801
  %v803 = vpop.f32.mrb[0].mxu0
  %804 = vmatprep.mubr.bf16.mxu0 0
  %805 = vmatmul.mubr.bf16.gmra.mrb[0].mxu0 %v312
  %v806 = vpop.f32.mrb[0].mxu0
  %v807 = vadd.f32 0.0, %v806
  %v808 = vpop.f32.mrb[0].mxu0
  %v809 = vpop.f32.mrb[0].mxu0
  %v810 = vadd.f32 0.0, %v809
  %v811 = vpop.f32.mrb[0].mxu0
  %812 = vmatprep.mubr.bf16.mxu0 0
  %813 = vmatmul.mubr.bf16.gmra.mrb[0].mxu0 %v313
  %v814 = vpop.f32.mrb[0].mxu0
  %v815 = vadd.f32 0.0, %v814
  %v816 = vpop.f32.mrb[0].mxu0
  %v817 = vpop.f32.mrb[0].mxu0
  %v818 = vadd.f32 0.0, %v817
  %v819 = vpop.f32.mrb[0].mxu0
  %820 = vdwg.mxu0
  %v821 = vpack.c.bf16 %v762, %v759
  %v822 = vpack.c.bf16 %v770, %v767
  %v823 = vpack.c.bf16 %v778, %v775
  %v824 = vpack.c.bf16 %v786, %v783
  %v825 = vpack.c.bf16 %v794, %v791
  %v826 = vpack.c.bf16 %v802, %v799
  %v827 = vpack.c.bf16 %v810, %v807
  %v828 = vpack.c.bf16 %v818, %v815
  %v830 = vlaneseq
  %v831 = vshrl.u32 %v830, 7
  %v832 = vsub.s32 0, %v831
  %v833 = vrot.slane %v570, %v832
  %835 = vmatprep.subr.bf16.mxu0 0
  %836 = vmatpush1.bf16.msra.mxu0 %v821
  %837 = vmatprep.subr.bf16.mxu0 0
  %838 = vmatpush1.bf16.msra.mxu0 %v822
  %839 = vmatprep.subr.bf16.mxu0 0
  %840 = vmatpush1.bf16.msra.mxu0 %v823
  %841 = vmatprep.subr.bf16.mxu0 0
  %842 = vmatpush1.bf16.msra.mxu0 %v824
  %843 = vmatprep.subr.bf16.mxu0 0
  %844 = vmatpush1.bf16.msra.mxu0 %v825
  %845 = vmatprep.subr.bf16.mxu0 0
  %846 = vmatpush1.bf16.msra.mxu0 %v826
  %847 = vmatprep.subr.bf16.mxu0 0
  %848 = vmatpush1.bf16.msra.mxu0 %v827
  %849 = vmatprep.subr.bf16.mxu0 0
  %850 = vmatpush1.bf16.msra.mxu0 %v828
  %851 = vmatprep.subr.bf16.mxu0 0
  %852 = vmatpush1.bf16.msra.mxu0 0
  %853 = vmatprep.subr.bf16.mxu0 0
  %854 = vmatpush1.bf16.msra.mxu0 0
  %855 = vmatprep.subr.bf16.mxu0 0
  %856 = vmatpush1.bf16.msra.mxu0 0
  %857 = vmatprep.subr.bf16.mxu0 0
  %858 = vmatpush1.bf16.msra.mxu0 0
  %859 = vmatprep.subr.bf16.mxu0 0
  %860 = vmatpush1.bf16.msra.mxu0 0
  %861 = vmatprep.subr.bf16.mxu0 0
  %862 = vmatpush1.bf16.msra.mxu0 0
  %863 = vmatprep.subr.bf16.mxu0 0
  %864 = vmatpush1.bf16.msra.mxu0 0
  %865 = vmatprep.subr.bf16.mxu0 0
  %866 = vmatpush1.bf16.msra.mxu0 0
  %867 = vmatprep.mubr.bf16.mxu0 0
  %868 = vmatmul.mubr.bf16.gmra.mrb[0].mxu0 %v306
  %v869 = vpop.f32.mrb[0].mxu0
  %v870 = vadd.f32 %v833, %v869
  %v871 = vpop.f32.mrb[0].mxu0
  %v872 = vpop.f32.mrb[0].mxu0
  %v873 = vadd.f32 %v833, %v872
  %v874 = vpop.f32.mrb[0].mxu0
  %875 = vmatprep.mubr.bf16.mxu0 0
  %876 = vmatmul.mubr.bf16.gmra.mrb[0].mxu0 %v307
  %v877 = vpop.f32.mrb[0].mxu0
  %v878 = vadd.f32 %v833, %v877
  %v879 = vpop.f32.mrb[0].mxu0
  %v880 = vpop.f32.mrb[0].mxu0
  %v881 = vadd.f32 %v833, %v880
  %v882 = vpop.f32.mrb[0].mxu0
  %883 = vmatprep.mubr.bf16.mxu0 0
  %884 = vmatmul.mubr.bf16.gmra.mrb[0].mxu0 %v308
  %v885 = vpop.f32.mrb[0].mxu0
  %v886 = vadd.f32 %v833, %v885
  %v887 = vpop.f32.mrb[0].mxu0
  %v888 = vpop.f32.mrb[0].mxu0
  %v889 = vadd.f32 %v833, %v888
  %v890 = vpop.f32.mrb[0].mxu0
  %891 = vmatprep.mubr.bf16.mxu0 0
  %892 = vmatmul.mubr.bf16.gmra.mrb[0].mxu0 %v309
  %v893 = vpop.f32.mrb[0].mxu0
  %v894 = vadd.f32 %v833, %v893
  %v895 = vpop.f32.mrb[0].mxu0
  %v896 = vpop.f32.mrb[0].mxu0
  %v897 = vadd.f32 %v833, %v896
  %v898 = vpop.f32.mrb[0].mxu0
  %899 = vmatprep.mubr.bf16.mxu0 0
  %900 = vmatmul.mubr.bf16.gmra.mrb[0].mxu0 %v310
  %v901 = vpop.f32.mrb[0].mxu0
  %v902 = vadd.f32 %v833, %v901
  %v903 = vpop.f32.mrb[0].mxu0
  %v904 = vpop.f32.mrb[0].mxu0
  %v905 = vadd.f32 %v833, %v904
  %v906 = vpop.f32.mrb[0].mxu0
  %907 = vmatprep.mubr.bf16.mxu0 0
  %908 = vmatmul.mubr.bf16.gmra.mrb[0].mxu0 %v311
  %v909 = vpop.f32.mrb[0].mxu0
  %v910 = vadd.f32 %v833, %v909
  %v911 = vpop.f32.mrb[0].mxu0
  %v912 = vpop.f32.mrb[0].mxu0
  %v913 = vadd.f32 %v833, %v912
  %v914 = vpop.f32.mrb[0].mxu0
  %915 = vmatprep.mubr.bf16.mxu0 0
  %916 = vmatmul.mubr.bf16.gmra.mrb[0].mxu0 %v312
  %v917 = vpop.f32.mrb[0].mxu0
  %v918 = vadd.f32 %v833, %v917
  %v919 = vpop.f32.mrb[0].mxu0
  %v920 = vpop.f32.mrb[0].mxu0
  %v921 = vadd.f32 %v833, %v920
  %v922 = vpop.f32.mrb[0].mxu0
  %923 = vmatprep.mubr.bf16.mxu0 0
  %924 = vmatmul.mubr.bf16.gmra.mrb[0].mxu0 %v313
  %v925 = vpop.f32.mrb[0].mxu0
  %v926 = vadd.f32 %v833, %v925
  %v927 = vpop.f32.mrb[0].mxu0
  %v928 = vpop.f32.mrb[0].mxu0
  %v929 = vadd.f32 %v833, %v928
  %v930 = vpop.f32.mrb[0].mxu0
  %931 = vdwg.mxu0
  %932 = vst [vmem:[%s6] sm:$0xff] %v870
  %933 = vst [vmem:[%s6 + $0x8] sm:$0xff] %v873
  %934 = vst [vmem:[%s6 + $0x10] sm:$0xff] %v878
  %935 = vst [vmem:[%s6 + $0x18] sm:$0xff] %v881
  %936 = vst [vmem:[%s6 + $0x20] sm:$0xff] %v886
  %937 = vst [vmem:[%s6 + $0x28] sm:$0xff] %v889
  %938 = vst [vmem:[%s6 + $0x30] sm:$0xff] %v894
  %939 = vst [vmem:[%s6 + $0x38] sm:$0xff] %v897
  %940 = vst [vmem:[%s6 + $0x40] sm:$0xff] %v902
  %941 = vst [vmem:[%s6 + $0x48] sm:$0xff] %v905
  %942 = vst [vmem:[%s6 + $0x50] sm:$0xff] %v910
  %943 = vst [vmem:[%s6 + $0x58] sm:$0xff] %v913
  %944 = vst [vmem:[%s6 + $0x60] sm:$0xff] %v918
  %945 = vst [vmem:[%s6 + $0x68] sm:$0xff] %v921
  %946 = vst [vmem:[%s6 + $0x70] sm:$0xff] %v926
  %947 = vst [vmem:[%s6 + $0x78] sm:$0xff] %v929
  // Predicated region
  $region26: #{run_sgc.1} parent=0 // pred_check
    _
  $region27: #{run_sgc.1} parent=0 // pred_check_branch
    %949 = sbr.rel (0) target = $region29
  $region28: #{run_sgc.1} parent=0 // pred_region
    _
  $region29: #{run_sgc.1} parent=0 // pred_fallthru
    _
  // Predicated region
  $region30: #{run_sgc.1} parent=0 // pred_check
    _
  $region31: #{run_sgc.1} parent=0 // pred_check_branch
    %951 = sbr.rel (0) target = $region33
  $region32: #{run_sgc.1} parent=0 // pred_region
    _
  $region33: #{run_sgc.1} parent=0 // pred_fallthru
    _

</llo_original>
